<compile_context>
chip_gen: v7x
topology: tpu7x:2x2x1
jax: 0.10.0
libtpu: 0.0.40
codegen_flags: <defaults>
</compile_context>

<pallas_src>
import functools
import math

import jax
import jax.numpy as jnp
from jax.experimental import pallas as pl
from jax.experimental.pallas import tpu as pltpu


def make_positional_encoding_table(n_embedding_dims: int, max_len: int = 5000,
                                   dtype=jnp.float32) -> jnp.ndarray:
    """Builds pe[max_len, n_embedding_dims] exactly like the PyTorch __init__."""
    position = jnp.arange(0, max_len, dtype=jnp.float32)[:, None]           # (L, 1)
    div_term = jnp.exp(jnp.arange(0, n_embedding_dims, 2, dtype=jnp.float32)
                       * (-math.log(10000.0) / n_embedding_dims))           # (D/2,)
    ang = position * div_term                                               # (L, D/2)
    pe = jnp.zeros((max_len, n_embedding_dims), dtype=jnp.float32)
    pe = pe.at[:, 0::2].set(jnp.sin(ang))
    pe = pe.at[:, 1::2].set(jnp.cos(ang))
    return pe.astype(dtype)


# ---------------------------------------------------------------------------
# Kernels
# ---------------------------------------------------------------------------

def _dropout_consts(dropout_p: float, dtype):
    thresh = jnp.uint32(min(int(dropout_p * float(2 ** 32)), 2 ** 32 - 1))
    scale = jnp.asarray(1.0 / (1.0 - dropout_p), dtype)
    return thresh, scale


def _pe_dropout_kernel_bcast(seed_ref, x_ref, pe_ref, o_ref, *,
                             dropout_p: float, training: bool):
    """x_ref/o_ref: (ts, tb, D); pe_ref: (ts, D) resident across batch steps."""
    if training and dropout_p >= 1.0:
        # torch.nn.Dropout(p=1.0) zeroes everything in training mode.
        o_ref[...] = jnp.zeros_like(o_ref)
        return

    x = x_ref[...].astype(o_ref.dtype)
    pe = pe_ref[...].astype(o_ref.dtype)
    y = x + pe[:, None, :]                       # sublane broadcast, no tiled temp

    if training and dropout_p > 0.0:
        blk = pl.program_id(0) * pl.num_programs(1) + pl.program_id(1)
        pltpu.prng_seed(seed_ref[0], blk)
        bits = pltpu.bitcast(pltpu.prng_random_bits(y.shape), jnp.uint32)
        thresh, scale = _dropout_consts(dropout_p, y.dtype)
        y = jnp.where(bits >= thresh, y * scale, jnp.zeros_like(y))

    o_ref[...] = y


def _pe_dropout_kernel_slab(seed_ref, x_ref, pe_ref, o_ref, *,
                            batch: int, embed: int,
                            dropout_p: float, training: bool):
    """x_ref/o_ref: (ts, B*D) lane-dense slab; pe_ref: (ts, D).

    The former jnp.tile(pe, (1, B)) is replaced by a static unrolled
    per-batch slice add: no block-sized replicated VMEM temp, no extra
    vector-store traffic beyond the output itself.
    """
    if training and dropout_p >= 1.0:
        o_ref[...] = jnp.zeros_like(o_ref)
        return

    pe = pe_ref[...].astype(o_ref.dtype)
    do_drop = training and dropout_p > 0.0
    if do_drop:
        pltpu.prng_seed(seed_ref[0], pl.program_id(0))
        thresh, scale = _dropout_consts(dropout_p, o_ref.dtype)

    for b in range(batch):                       # static unroll (small B only)
        cols = slice(b * embed, (b + 1) * embed)
        y = x_ref[:, cols].astype(o_ref.dtype) + pe
        if do_drop:
            bits = pltpu.bitcast(pltpu.prng_random_bits(y.shape), jnp.uint32)
            y = jnp.where(bits >= thresh, y * scale, jnp.zeros_like(y))
        o_ref[:, cols] = y


# ---------------------------------------------------------------------------
# Wrapper / block sizing
# ---------------------------------------------------------------------------

_MAX_UNROLL_BATCH = 16       # cap for the unrolled per-batch slab kernel
_TEMP_BYTES_PER_ELEM = 12    # ~3 block-sized f32 temps live in the body (upcast,
                             # prng bits, select) -> counted in the VMEM budget


def _sublane_multiple(dtype) -> int:
    # Packed-sublane rounding: 8 rows for 32-bit, 16 for bf16/f16, 32 for 8-bit.
    return 8 * max(1, 4 // jnp.dtype(dtype).itemsize)


def _vmem_budget_bytes() -> int:
    # Generation-aware: leave generous headroom below physical VMEM
    # (64 MiB/TC on v7x, 128 MiB on v5e/v6e); conservative fallback otherwise.
    try:
        phys = int(getattr(pltpu.get_tpu_info(), "vmem_capacity_bytes",
                           64 * 1024 * 1024))
    except Exception:
        phys = 64 * 1024 * 1024
    return int(min(max(phys - 20 * 1024 * 1024, 32 * 1024 * 1024),
                   80 * 1024 * 1024))


def positional_encoding_forward(x: jnp.ndarray, pe_table: jnp.ndarray, *,
                                dropout_p: float = 0.1,
                                training: bool = False,
                                seed: int = 0,
                                promote_dtype: bool = True) -> jnp.ndarray:
    """x: [S, B, D]; pe_table: [max_len, D]. Returns dropout(x + pe[:S])."""
    S, B, D = x.shape
    max_len, D_pe = pe_table.shape
    assert D_pe == D, "pe_table embedding dim mismatch"
    assert S <= max_len, "sequence longer than positional-encoding table"

    # promote_dtype=True matches torch type promotion (half x + f32 pe -> f32);
    # False keeps x.dtype (halves write bytes for bf16 inputs -- opt-in).
    out_dtype = (jnp.result_type(x.dtype, pe_table.dtype) if promote_dtype
                 else x.dtype)
    in_sz = jnp.dtype(x.dtype).itemsize
    out_sz = jnp.dtype(out_dtype).itemsize
    pe_sz = jnp.dtype(pe_table.dtype).itemsize

    sub = _sublane_multiple(x.dtype)
    budget = _vmem_budget_bytes()
    seed_arr = jnp.array([seed], dtype=jnp.int32)
    kern_kw = dict(dropout_p=float(dropout_p), training=bool(training))

    # Double-buffered in/out blocks + in-body f32 temps, per element.
    per_elem = 2 * (in_sz + out_sz) + _TEMP_BYTES_PER_ELEM

    use_slab = (D % 128 != 0) and (B <= _MAX_UNROLL_BATCH)

    if use_slab:
        # --- Lane-unaligned D, small batch: (S, B*D) slab, 1-D grid over seq.
        x2 = x.reshape(S, B * D)
        row_bytes = B * D * per_elem + 2 * D * pe_sz
        ts = max(sub, (budget // max(row_bytes, 1)) // sub * sub)
        ts = min(ts, pl.cdiv(S, sub) * sub)
        while pl.cdiv(S, ts) < 2 and ts > sub:          # keep both v7x cores fed
            ts = max(sub, (ts // 2) // sub * sub)
        grid = (pl.cdiv(S, ts),)
        vmem_limit = int(min(max(ts * row_bytes + (4 << 20), 32 << 20),
                             budget + (16 << 20)))

        kernel = functools.partial(_pe_dropout_kernel_slab,
                                   batch=B, embed=D, **kern_kw)
        out2 = pl.pallas_call(
            kernel,
            out_shape=jax.ShapeDtypeStruct((S, B * D), out_dtype),
            grid_spec=pltpu.PrefetchScalarGridSpec(
                num_scalar_prefetch=1,
                grid=grid,
                in_specs=[
                    pl.BlockSpec((ts, B * D), lambda i, s: (i, 0)),
                    # Window directly into the full pe table (no wrapper copy).
                    pl.BlockSpec((ts, D), lambda i, s: (i, 0)),
                ],
                out_specs=pl.BlockSpec((ts, B * D), lambda i, s: (i, 0)),
            ),
            compiler_params=pltpu.CompilerParams(
                dimension_semantics=("parallel",),
                vmem_limit_bytes=vmem_limit),
        )(seed_arr, x2, pe_table)
        return out2.reshape(S, B, D)

    # --- General / lane-aligned path: 2-D grid (seq blocks, batch blocks),
    #     x/out blocks (ts, tb, D), pe block (ts, D) resident across batch.
    def blk_bytes(ts_, tb_):
        return ts_ * tb_ * D * per_elem + 2 * ts_ * D * pe_sz

    tb = B
    while tb > 8 and blk_bytes(sub, tb) > budget:       # lane-axis (batch) tiling
        tb = max(8, ((tb // 2) + 7) // 8 * 8)
    row_bytes = tb * D * per_elem + 2 * D * pe_sz
    ts = max(sub, (budget // max(row_bytes, 1)) // sub * sub)
    ts = min(ts, pl.cdiv(S, sub) * sub)
    while pl.cdiv(S, ts) * pl.cdiv(B, tb) < 2 and ts > sub:
        ts = max(sub, (ts // 2) // sub * sub)
    grid = (pl.cdiv(S, ts), pl.cdiv(B, tb))
    vmem_limit = int(min(max(blk_bytes(ts, tb) + (4 << 20), 32 << 20),
                         budget + (16 << 20)))

    kernel = functools.partial(_pe_dropout_kernel_bcast, **kern_kw)
    out = pl.pallas_call(
        kernel,
        out_shape=jax.ShapeDtypeStruct((S, B, D), out_dtype),
        grid_spec=pltpu.PrefetchScalarGridSpec(
            num_scalar_prefetch=1,
            grid=grid,
            in_specs=[
                pl.BlockSpec((ts, tb, D), lambda i, j, s: (i, j, 0)),
                # index_map ignores the (inner) batch grid axis -> the pe block
                # stays resident across batch steps, no re-DMA.
                pl.BlockSpec((ts, D), lambda i, j, s: (i, 0)),
            ],
            out_specs=pl.BlockSpec((ts, tb, D), lambda i, j, s: (i, j, 0)),
        ),
        compiler_params=pltpu.CompilerParams(
            dimension_semantics=("parallel", "parallel"),
            vmem_limit_bytes=vmem_limit),
    )(seed_arr, x, pe_table)
    return out


if __name__ == "__main__":
    key = jax.random.PRNGKey(0)
    k1, k2 = jax.random.split(key)

    # Case 1: module-default-ish small shape, D=32 -> lane-unaligned slab path.
    S, B, D = 8, 2, 32
    x = jax.random.normal(k1, (S, B, D), dtype=jnp.float32)
    pe_table = make_positional_encoding_table(D, max_len=5000)
    out = jax.block_until_ready(
        positional_encoding_forward(x, pe_table, dropout_p=0.1, training=False))
    ref = x + pe_table[:S][:, None, :]
    assert out.shape == (S, B, D)
    assert jnp.allclose(out, ref, atol=1e-6), "eval-mode mismatch (slab path)"

    # Case 2: D=128 -> lane-aligned 3-D path (pe block resident across batch).
    S2, B2, D2 = 16, 2, 128
    x2 = jax.random.normal(k2, (S2, B2, D2), dtype=jnp.float32)
    pe2 = make_positional_encoding_table(D2, max_len=5000)
    out2 = jax.block_until_ready(
        positional_encoding_forward(x2, pe2, dropout_p=0.1, training=False))
    ref2 = x2 + pe2[:S2][:, None, :]
    assert out2.shape == (S2, B2, D2)
    assert jnp.allclose(out2, ref2, atol=1e-6), "eval-mode mismatch (bcast path)"

    # Training-mode dropout uses the TPU hardware PRNG (pltpu.prng_*), which has
    # no CPU/interpret lowering -- only exercise it on a real TPU backend.
    if jax.default_backend() == "tpu":
        t1 = jax.block_until_ready(positional_encoding_forward(
            x, pe_table, dropout_p=0.1, training=True, seed=123))
        t2 = jax.block_until_ready(positional_encoding_forward(
            x2, pe2, dropout_p=0.1, training=True, seed=123))
        assert t1.shape == x.shape and t2.shape == x2.shape
        # Kept values must equal ref / (1 - p); dropped values are exactly 0.
        mask = t1 != 0
        assert jnp.allclose(t1, jnp.where(mask, ref / (1.0 - 0.1), 0.0),
                            atol=1e-5), "training-mode scaling mismatch"

    print("KERNEL_OK")
</pallas_src>

<mosaic_0001>
module attributes {stable_mosaic.version = 11 : i64} {
  func.func @_pe_dropout_kernel_slab(%arg0: i32, %arg1: memref<1xi32, #tpu.memory_space<smem>>, %arg2: memref<8x64xf32, #tpu.memory_space<vmem>>, %arg3: memref<8x32xf32, #tpu.memory_space<vmem>>, %arg4: memref<8x64xf32, #tpu.memory_space<vmem>>) attributes {dimension_semantics = [#tpu.dimension_semantics<parallel>], iteration_bounds = array<i64: 1>, scalar_prefetch = 1 : i64, scratch_operands = 0 : i64, tpu.core_type = #tpu.core_type<tc>, window_params = [{transform_indices = @transform_0, window_bounds = array<i64: 8, 64>}, {transform_indices = @transform_1, window_bounds = array<i64: 8, 32>}, {transform_indices = @transform_2, window_bounds = array<i64: 8, 64>}]} {
    %c0 = arith.constant 0 : index
    %c0_0 = arith.constant 0 : index
    %0 = vector.load %arg3[%c0, %c0_0] : memref<8x32xf32, #tpu.memory_space<vmem>>, vector<8x32xf32>
    %c0_1 = arith.constant 0 : index
    %c0_2 = arith.constant 0 : index
    %1 = vector.load %arg2[%c0_1, %c0_2] : memref<8x64xf32, #tpu.memory_space<vmem>>, vector<8x32xf32>
    %2 = arith.addf %1, %0 : vector<8x32xf32>
    %c0_3 = arith.constant 0 : index
    %c0_4 = arith.constant 0 : index
    %3 = vector.load %arg4[%c0_3, %c0_4] : memref<8x64xf32, #tpu.memory_space<vmem>>, vector<8x32xf32>
    tpu.vector_store %arg4[%c0_3, %c0_4], %2 {strides = array<i32>} : memref<8x64xf32, #tpu.memory_space<vmem>>, vector<8x32xf32>,
    %c0_5 = arith.constant 0 : index
    %c32 = arith.constant 32 : index
    %4 = vector.load %arg2[%c0_5, %c32] : memref<8x64xf32, #tpu.memory_space<vmem>>, vector<8x32xf32>
    %5 = arith.addf %4, %0 : vector<8x32xf32>
    %c0_6 = arith.constant 0 : index
    %c32_7 = arith.constant 32 : index
    %6 = vector.load %arg4[%c0_6, %c32_7] : memref<8x64xf32, #tpu.memory_space<vmem>>, vector<8x32xf32>
    tpu.vector_store %arg4[%c0_6, %c32_7], %5 {strides = array<i32>} : memref<8x64xf32, #tpu.memory_space<vmem>>, vector<8x32xf32>,
    return
  }
  func.func @transform_0(%arg0: i32, %arg1: memref<1xi32, #tpu.memory_space<smem>>) -> (i32, i32) {
    %c0_i32 = arith.constant 0 : i32
    %c0_i32_0 = arith.constant 0 : i32
    return %arg0, %c0_i32 : i32, i32
  }
  func.func @transform_1(%arg0: i32, %arg1: memref<1xi32, #tpu.memory_space<smem>>) -> (i32, i32) {
    %c0_i32 = arith.constant 0 : i32
    %c0_i32_0 = arith.constant 0 : i32
    return %arg0, %c0_i32 : i32, i32
  }
  func.func @transform_2(%arg0: i32, %arg1: memref<1xi32, #tpu.memory_space<smem>>) -> (i32, i32) {
    %c0_i32 = arith.constant 0 : i32
    %c0_i32_0 = arith.constant 0 : i32
    return %arg0, %c0_i32 : i32, i32
  }
}

</mosaic_0001>

<llo_original>
// kernel: tpu_custom_call.1
$region0: #{tpu_custom_call.1}
  #allocation0 [shape = 'u32[]', space=smem, size = 0x4, offset = 0x4, fixed_abs, tag = 'smem constant byte address 0x4 - core index']
  #allocation1 [shape = 'u32[144,128]{1,0:T(1,128)}', space=vmem, size = 0x12000, scoped, tag = 'internal scratch']
  #allocation2 [shape = 's32[1]{0}', space=sflag, size = 0x4, scoped, tag = 'scoped memory for tpu_custom_call.1']
  #allocation3 [shape = 's32[1]{0:T(128)S(6)}', space=smem, size = 0x200, scoped, tag = 'prefetched SMEM operand 0']
  %s0 = inlined_call_operand.<no memory space> [shape: s32[1], index: 0, kind: input, shape index: {}]
  %s1 = inlined_call_operand.vmem [shape: f32[8,64], index: 1, kind: input, shape index: {}]
  %s2 = inlined_call_operand.vmem [shape: f32[5000,32], index: 2, kind: input, shape index: {}]
  %s3 = inlined_call_operand.hbm [shape: f32[8,64], index: 3, kind: output, shape index: {}]
  %s4 = sld [smem:[#allocation0]]
  $region18: #{tpu_custom_call.1} parent=0
    _
  %s6 = ssub.s32 1, %s4
  %s7 = scalar_select 0, %s6, %s4
  %8 = sst [smem:[#allocation3]] %s0
  $region1: #{tpu_custom_call.1} parent=0
    #allocation4 [shape = 'u8[4096]{0}', space=vmem, size = 0x1000, scoped, tag = 'output window, operand 0, single buffered']
    #allocation5 [shape = 's32[1]{0}', space=sflag, size = 0x4, scoped, tag = 'scoped memory for tpu_custom_call.1']
    %9 = vsyncpa [#allocation5], 0
    // Predicated region
    $region2: #{tpu_custom_call.1} parent=1 // pred_check
      _
    $region3: #{tpu_custom_call.1} parent=1 // pred_check_branch
      %11 = sbr.rel (0) target = $region5
    $region4: #{tpu_custom_call.1} parent=1 // pred_region
      _
    $region5: #{tpu_custom_call.1} parent=1 // pred_fallthru
      _
    // Predicated region
    $region6: #{tpu_custom_call.1} parent=1 // pred_check
      _
    $region7: #{tpu_custom_call.1} parent=1 // pred_check_branch
      %13 = sbr.rel (0) target = $region9
    $region8: #{tpu_custom_call.1} parent=1 // pred_region
      _
    $region9: #{tpu_custom_call.1} parent=1 // pred_fallthru
      _
    %v14 = vld [vmem:[%s2] sm:$0xff]
    %v15 = vld [vmem:[%s1] sm:$0xff]
    %v16 = vadd.f32 %v15, %v14
    %vm17 = vcmask 261120
    %18 = vst.msk [vmem:[#allocation4] sm:$0xff] %vm17, %v16
    %v19 = vld [vmem:[%s1] sm:$0xff]
    %21 = vrot.lane.b32.xlu0 %v14, 32
    %v22 = vpop.permute.xlu0 %21
    %v24 = vadd.f32 %v19, %v22
    %vm25 = vcmask 523520
    %26 = vst.msk [vmem:[#allocation4] sm:$0xff] %vm25, %v24
    // Predicated region
    $region10: #{tpu_custom_call.1} parent=1 // pred_check
      _
    $region11: #{tpu_custom_call.1} parent=1 // pred_check_branch
      %28 = sbr.rel (0) target = $region13
    $region12: #{tpu_custom_call.1} parent=1 // pred_region
      %s30 = ssub.s32 128, 128
      %31 = vsyncadd [#allocation5], %s30
      %s33 = sshll.u32 [#allocation4], 4
      %s34 = int_to_ptr.vmem [resolvable:$true] %s33
      %36 = dma.vmem_to_hbm [thread:$0]  %s34, 128, %s3, [#allocation5]
    $region13: #{tpu_custom_call.1} parent=1 // pred_fallthru
      _
    // Predicated region
    $region14: #{tpu_custom_call.1} parent=1 // pred_check
      _
    $region15: #{tpu_custom_call.1} parent=1 // pred_check_branch
      %38 = sbr.rel (0) target = $region17
    $region16: #{tpu_custom_call.1} parent=1 // pred_region
      %39 = dma.done [#allocation5], 128
    $region17: #{tpu_custom_call.1} parent=1 // pred_fallthru
      _
    %40 = vsyncpa [#allocation5], 1

</llo_original>
